<compile_context>
chip_gen: v7x
topology: tpu7x:2x2x1
jax: 0.10.0
libtpu: 0.0.40
codegen_flags: <defaults>
</compile_context>

<pallas_src>
import math

import jax
import jax.numpy as jnp
from jax.experimental import pallas as pl
from jax.experimental.pallas import tpu as pltpu

_LANE = 128
_MIB = 1024 * 1024


def _round_up(x: int, m: int) -> int:
    return (x + m - 1) // m * m


def _sublane_packing(dtype) -> int:
    # Rows per 32-bit sublane: f32 -> 8, bf16 -> 16, int8/fp8 -> 32.
    return {1: 32, 2: 16}.get(jnp.dtype(dtype).itemsize, 8)


def _chip_info():
    """(vmem_capacity_bytes, tensorcores_per_device) with safe fallbacks."""
    kind = ""
    try:
        kind = (jax.devices()[0].device_kind or "").lower()
    except Exception:
        pass
    vmem_cap = None
    try:
        vmem_cap = int(pltpu.get_tpu_info().vmem_capacity_bytes)
    except Exception:
        vmem_cap = None
    if not vmem_cap or vmem_cap <= 0:
        vmem_cap = 64 * _MIB if "v7" in kind else 128 * _MIB
    # Parts where a grid axis marked "parallel" shards across 2 TensorCores.
    num_tc = 2 if any(t in kind for t in ("v7", "v4", "v5p")) else 1
    return vmem_cap, num_tc


def _spec(shape, index_map, mode=None):
    """BlockSpec helper that degrades gracefully if pipeline_mode is unsupported."""
    if mode is None:
        return pl.BlockSpec(shape, index_map)
    try:
        return pl.BlockSpec(shape, index_map, pipeline_mode=mode)
    except TypeError:
        return pl.BlockSpec(shape, index_map)


_BUFFERED_ONE = pl.Buffered(1) if hasattr(pl, "Buffered") else None


def _mlp_kernel(x_ref, w1_ref, b1_ref, w2_ref, b2_ref, o_ref, acc_ref):
    h_idx = pl.program_id(1)

    @pl.when(h_idx == 0)
    def _():
        acc_ref[...] = jnp.zeros_like(acc_ref)

    # First matmul on the MXU, f32 accumulation; bias added in f32.
    h = (jnp.dot(x_ref[...], w1_ref[...], preferred_element_type=jnp.float32)
         + b1_ref[...])
    # Exact GELU (torch nn.GELU() default, approximate='none'), in f32.
    g = 0.5 * h * (1.0 + jax.lax.erf(h * (1.0 / math.sqrt(2.0))))
    # Partial second matmul for this H-chunk, accumulated in f32 VMEM scratch.
    acc_ref[...] += jnp.dot(g.astype(w2_ref.dtype), w2_ref[...],
                            preferred_element_type=jnp.float32)

    @pl.when(h_idx == pl.num_programs(1) - 1)
    def _():
        o_ref[...] = (acc_ref[...] + b2_ref[...]).astype(o_ref.dtype)


def prepare_mlp_params(w1, b1, w2, b2):
    """Pad weights/biases ONCE at init.

    w1: (Cin, H), b1: (H,), w2: (H, Cout), b2: (Cout,)  (pre-transposed vs torch).
    Hidden/output dims are zero-padded to lane (128) multiples; zero padding is
    exact (GELU(0)=0, zero rows/cols/bias contribute nothing).
    """
    Cin, H = w1.shape
    H2, Cout = w2.shape
    assert H2 == H
    H_p = _round_up(H, _LANE)
    Cout_p = _round_up(Cout, _LANE)
    w1_p = jnp.pad(w1, ((0, 0), (0, H_p - H))) if H_p != H else w1
    w2_p = (jnp.pad(w2, ((0, H_p - H), (0, Cout_p - Cout)))
            if (H_p, Cout_p) != (H, Cout) else w2)
    # Biases in f32 so in-kernel adds land directly on the f32 accumulator.
    b1_p = jnp.pad(b1, (0, H_p - H)).astype(jnp.float32).reshape(1, H_p)
    b2_p = jnp.pad(b2, (0, Cout_p - Cout)).astype(jnp.float32).reshape(1, Cout_p)
    return {"w1": w1_p, "b1": b1_p, "w2": w2_p, "b2": b2_p,
            "in_channels": Cin, "hidden": H, "out_channels": Cout}


def mlp_pallas(x, params, *, tm=None):
    """y = GELU(x @ w1 + b1) @ w2 + b2, x: (B, S, Cin) -> (B, S, Cout)."""
    w1, b1 = params["w1"], params["b1"]
    w2, b2 = params["w2"], params["b2"]
    Cin, Cout = params["in_channels"], params["out_channels"]
    H_p, Cout_p = w1.shape[1], w2.shape[1]

    B, S, Cin_x = x.shape
    assert Cin_x == Cin
    M = B * S
    x2 = x.reshape(M, Cin)              # pure reshape; no padding copy of x

    xb = jnp.dtype(x.dtype).itemsize
    wb = jnp.dtype(w1.dtype).itemsize
    packing = _sublane_packing(x.dtype)

    vmem_cap, num_tc = _chip_info()
    vmem_budget = int(vmem_cap * 0.85)  # ~108 MiB on v5e/v6e, ~54 MiB on v7x

    # ---- row tiling --------------------------------------------------------
    if tm is None:
        tm = 512 if vmem_cap >= 96 * _MIB else 256
    tm = _round_up(tm, max(packing, _LANE))
    tm_eff = min(tm, _round_up(M, packing))
    # Multi-TensorCore parts: ensure both cores get a row tile when there is
    # enough work (grid axis 0 is marked "parallel"). No-op on v5e/v6e.
    if num_tc > 1 and pl.cdiv(M, tm_eff) < num_tc and M >= num_tc * _LANE:
        tm_eff = _round_up(pl.cdiv(M, num_tc), packing)
    num_row_tiles = pl.cdiv(M, tm_eff)

    # ---- hidden (reduction) tiling ------------------------------------------
    def vmem_needed(tm_, th_, nh_):
        wbuf = 1 if nh_ == 1 else 2      # resident weights are single-buffered
        return (2 * tm_ * Cin * xb                       # x tile   (double buffered)
                + 2 * tm_ * Cout_p * xb                  # out tile (double buffered)
                + tm_ * Cout_p * 4                       # f32 accumulator scratch
                + wbuf * (Cin * th_ + th_ * Cout_p) * wb # w1 / w2 chunks
                + wbuf * th_ * 4 + Cout_p * 4            # biases (f32)
                + 3 * tm_ * th_ * 4)                     # f32 h/g intermediates + slack

    def pick_h_tiles(tm_):
        units = H_p // _LANE
        for nh_ in range(1, units + 1):
            if units % nh_:
                continue                 # th must divide H_p exactly (reduction axis)
            th_ = (units // nh_) * _LANE
            if vmem_needed(tm_, th_, nh_) <= vmem_budget:
                return th_, nh_
        return _LANE, units

    th, nh = pick_h_tiles(tm_eff)
    while vmem_needed(tm_eff, th, nh) > vmem_budget and tm_eff > packing:
        tm_eff = max(packing, _round_up(tm_eff // 2, packing))
        num_row_tiles = pl.cdiv(M, tm_eff)
        th, nh = pick_h_tiles(tm_eff)

    needed = vmem_needed(tm_eff, th, nh)
    vmem_limit = int(min(max(32 * _MIB, 2 * needed), vmem_budget))

    M_work = num_row_tiles * tm_eff
    weight_streams = 1 if nh == 1 else num_row_tiles
    flops = 2 * M_work * (Cin * H_p + H_p * Cout_p)
    bytes_accessed = (M * Cin * xb + M * Cout_p * xb
                      + weight_streams * (Cin * H_p + H_p * Cout_p) * wb
                      + (H_p + Cout_p) * 4)

    w_mode = _BUFFERED_ONE if nh == 1 else None   # single-buffer constant blocks only

    out2 = pl.pallas_call(
        _mlp_kernel,
        out_shape=jax.ShapeDtypeStruct((M, Cout_p), x.dtype),
        grid_spec=pltpu.PrefetchScalarGridSpec(
            num_scalar_prefetch=0,
            grid=(num_row_tiles, nh),
            in_specs=[
                _spec((tm_eff, Cin), lambda i, h: (i, 0)),
                _spec((Cin, th), lambda i, h: (0, h), w_mode),
                _spec((1, th), lambda i, h: (0, h), w_mode),
                _spec((th, Cout_p), lambda i, h: (h, 0), w_mode),
                _spec((1, Cout_p), lambda i, h: (0, 0), _BUFFERED_ONE),
            ],
            out_specs=pl.BlockSpec((tm_eff, Cout_p), lambda i, h: (i, 0)),
            scratch_shapes=[pltpu.VMEM((tm_eff, Cout_p), jnp.float32)],
        ),
        compiler_params=pltpu.CompilerParams(
            dimension_semantics=("parallel", "arbitrary"),
            vmem_limit_bytes=vmem_limit,
        ),
        cost_estimate=pl.CostEstimate(
            flops=flops,
            transcendentals=M_work * H_p,
            bytes_accessed=bytes_accessed,
        ),
    )(x2, w1, b1, w2, b2)

    if Cout_p != Cout:
        # TODO(synk): emit masked (unpadded) stores in-kernel to avoid this
        # wrapper-side slice copy when out_channels is not lane-aligned.
        out2 = out2[:, :Cout]
    return out2.reshape(B, S, Cout)


def mlp_reference(x, w1, b1, w2, b2):
    h = jnp.dot(x, w1, precision="highest") + b1
    g = 0.5 * h * (1.0 + jax.lax.erf(h / jnp.sqrt(2.0).astype(h.dtype)))
    return jnp.dot(g, w2, precision="highest") + b2


if __name__ == "__main__":
    # Module config: width=32, in_channels=width, out_channels=width -> hidden=128.
    width = 32
    in_channels = width
    out_channels = width
    hidden = width * 4

    B, S = 2, 8  # 16 token rows

    key = jax.random.PRNGKey(0)
    kx, kw1, kb1, kw2, kb2 = jax.random.split(key, 5)

    x = jax.random.normal(kx, (B, S, in_channels), dtype=jnp.float32)

    # nn.Linear-style init, stored transposed as (in, out) so the kernel does
    # x @ W + b (== torch's x @ W.T + b).
    bound1 = 1.0 / math.sqrt(in_channels)
    w1 = jax.random.uniform(kw1, (in_channels, hidden), jnp.float32, -bound1, bound1)
    b1 = jax.random.uniform(kb1, (hidden,), jnp.float32, -bound1, bound1)
    bound2 = 1.0 / math.sqrt(hidden)
    w2 = jax.random.uniform(kw2, (hidden, out_channels), jnp.float32, -bound2, bound2)
    b2 = jax.random.uniform(kb2, (out_channels,), jnp.float32, -bound2, bound2)

    # Pad weights/biases once at "init" (not per call).
    params = prepare_mlp_params(w1, b1, w2, b2)

    out = mlp_pallas(x, params)
    out = jax.block_until_ready(out)

    ref = mlp_reference(x, w1, b1, w2, b2)
    assert out.shape == (B, S, out_channels)
    assert jnp.allclose(out, ref, atol=2e-5, rtol=2e-5), "mismatch vs reference"

    print("KERNEL_OK")
</pallas_src>

<mosaic_0001>
module attributes {stable_mosaic.version = 11 : i64} {
  func.func @_mlp_kernel(%arg0: i32, %arg1: i32, %arg2: memref<16x32xf32, #tpu.memory_space<vmem>>, %arg3: memref<32x128xf32, #tpu.memory_space<vmem>>, %arg4: memref<1x128xf32, #tpu.memory_space<vmem>>, %arg5: memref<128x128xf32, #tpu.memory_space<vmem>>, %arg6: memref<1x128xf32, #tpu.memory_space<vmem>>, %arg7: memref<16x128xf32, #tpu.memory_space<vmem>>, %arg8: memref<16x128xf32, #tpu.memory_space<vmem>>) attributes {dimension_semantics = [#tpu.dimension_semantics<parallel>, #tpu.dimension_semantics<arbitrary>], iteration_bounds = array<i64: 1, 1>, scalar_prefetch = 0 : i64, scratch_operands = 1 : i64, tpu.core_type = #tpu.core_type<tc>, window_params = [{transform_indices = @transform_0, window_bounds = array<i64: 16, 32>}, {pipeline_mode = #tpu.pipeline_mode<synchronous>, transform_indices = @transform_1, window_bounds = array<i64: 32, 128>}, {pipeline_mode = #tpu.pipeline_mode<synchronous>, transform_indices = @transform_2, window_bounds = array<i64: 1, 128>}, {pipeline_mode = #tpu.pipeline_mode<synchronous>, transform_indices = @transform_3, window_bounds = array<i64: 128, 128>}, {pipeline_mode = #tpu.pipeline_mode<synchronous>, transform_indices = @transform_4, window_bounds = array<i64: 1, 128>}, {transform_indices = @transform_5, window_bounds = array<i64: 16, 128>}]} {
    %c0_i32 = arith.constant 0 : i32
    %0 = arith.cmpi eq, %arg1, %c0_i32 : i32
    %1 = arith.extui %0 : i1 to i32
    %c0_i32_0 = arith.constant 0 : i32
    %2 = arith.cmpi ne, %1, %c0_i32_0 : i32
    scf.if %2 {
      %cst_18 = arith.constant 0.000000e+00 : f32
      %25 = vector.broadcast %cst_18 : f32 to vector<16x128xf32>
      %c0_19 = arith.constant 0 : index
      %c0_20 = arith.constant 0 : index
      %26 = vector.load %arg8[%c0_19, %c0_20] : memref<16x128xf32, #tpu.memory_space<vmem>>, vector<16x128xf32>
      tpu.vector_store %arg8[%c0_19, %c0_20], %25 {strides = array<i32>} : memref<16x128xf32, #tpu.memory_space<vmem>>, vector<16x128xf32>,
    } else {
    }
    %c0 = arith.constant 0 : index
    %c0_1 = arith.constant 0 : index
    %3 = vector.load %arg2[%c0, %c0_1] : memref<16x32xf32, #tpu.memory_space<vmem>>, vector<16x32xf32>
    %c0_2 = arith.constant 0 : index
    %c0_3 = arith.constant 0 : index
    %4 = vector.load %arg3[%c0_2, %c0_3] : memref<32x128xf32, #tpu.memory_space<vmem>>, vector<32x128xf32>
    %cst = arith.constant dense<0.000000e+00> : vector<16x128xf32>
    %5 = tpu.matmul %3, %4, %cst {dimension_numbers = #tpu.dot_dimension_numbers<[1], [0], [0], [1], [0, 0, 1, 1], [], []>} : vector<16x32xf32>, vector<32x128xf32>, vector<16x128xf32> -> vector<16x128xf32>
    %c0_4 = arith.constant 0 : index
    %c0_5 = arith.constant 0 : index
    %6 = vector.load %arg4[%c0_4, %c0_5] : memref<1x128xf32, #tpu.memory_space<vmem>>, vector<1x128xf32>
    %7 = vector.broadcast %6 : vector<1x128xf32> to vector<16x128xf32>
    %8 = arith.addf %5, %7 : vector<16x128xf32>
    %cst_6 = arith.constant 5.000000e-01 : f32
    %9 = vector.broadcast %cst_6 : f32 to vector<16x128xf32>
    %10 = arith.mulf %9, %8 : vector<16x128xf32>
    %cst_7 = arith.constant 0.707106769 : f32
    %11 = vector.broadcast %cst_7 : f32 to vector<16x128xf32>
    %12 = arith.mulf %8, %11 : vector<16x128xf32>
    %13 = math.erf %12 : vector<16x128xf32>
    %cst_8 = arith.constant 1.000000e+00 : f32
    %14 = vector.broadcast %cst_8 : f32 to vector<16x128xf32>
    %15 = arith.addf %14, %13 : vector<16x128xf32>
    %16 = arith.mulf %10, %15 : vector<16x128xf32>
    %c0_9 = arith.constant 0 : index
    %c0_10 = arith.constant 0 : index
    %17 = vector.load %arg8[%c0_9, %c0_10] : memref<16x128xf32, #tpu.memory_space<vmem>>, vector<16x128xf32>
    %c0_11 = arith.constant 0 : index
    %c0_12 = arith.constant 0 : index
    %18 = vector.load %arg5[%c0_11, %c0_12] : memref<128x128xf32, #tpu.memory_space<vmem>>, vector<128x128xf32>
    %cst_13 = arith.constant dense<0.000000e+00> : vector<16x128xf32>
    %19 = tpu.matmul %16, %18, %cst_13 {dimension_numbers = #tpu.dot_dimension_numbers<[1], [0], [0], [1], [0, 0, 1, 1], [], []>} : vector<16x128xf32>, vector<128x128xf32>, vector<16x128xf32> -> vector<16x128xf32>
    %20 = arith.addf %17, %19 : vector<16x128xf32>
    %c0_14 = arith.constant 0 : index
    %c0_15 = arith.constant 0 : index
    %21 = vector.load %arg8[%c0_14, %c0_15] : memref<16x128xf32, #tpu.memory_space<vmem>>, vector<16x128xf32>
    tpu.vector_store %arg8[%c0_14, %c0_15], %20 {strides = array<i32>} : memref<16x128xf32, #tpu.memory_space<vmem>>, vector<16x128xf32>,
    %c0_i32_16 = arith.constant 0 : i32
    %22 = arith.cmpi eq, %arg1, %c0_i32_16 : i32
    %23 = arith.extui %22 : i1 to i32
    %c0_i32_17 = arith.constant 0 : i32
    %24 = arith.cmpi ne, %23, %c0_i32_17 : i32
    scf.if %24 {
      %c0_18 = arith.constant 0 : index
      %c0_19 = arith.constant 0 : index
      %25 = vector.load %arg8[%c0_18, %c0_19] : memref<16x128xf32, #tpu.memory_space<vmem>>, vector<16x128xf32>
      %c0_20 = arith.constant 0 : index
      %c0_21 = arith.constant 0 : index
      %26 = vector.load %arg6[%c0_20, %c0_21] : memref<1x128xf32, #tpu.memory_space<vmem>>, vector<1x128xf32>
      %27 = vector.broadcast %26 : vector<1x128xf32> to vector<16x128xf32>
      %28 = arith.addf %25, %27 : vector<16x128xf32>
      %c0_22 = arith.constant 0 : index
      %c0_23 = arith.constant 0 : index
      %29 = vector.load %arg7[%c0_22, %c0_23] : memref<16x128xf32, #tpu.memory_space<vmem>>, vector<16x128xf32>
      tpu.vector_store %arg7[%c0_22, %c0_23], %28 {strides = array<i32>} : memref<16x128xf32, #tpu.memory_space<vmem>>, vector<16x128xf32>,
    } else {
    }
    return
  }
  func.func @transform_0(%arg0: i32, %arg1: i32) -> (i32, i32) {
    %c0_i32 = arith.constant 0 : i32
    %c0_i32_0 = arith.constant 0 : i32
    return %arg0, %c0_i32 : i32, i32
  }
  func.func @transform_1(%arg0: i32, %arg1: i32) -> (i32, i32) {
    %c0_i32 = arith.constant 0 : i32
    %c0_i32_0 = arith.constant 0 : i32
    return %c0_i32, %arg1 : i32, i32
  }
  func.func @transform_2(%arg0: i32, %arg1: i32) -> (i32, i32) {
    %c0_i32 = arith.constant 0 : i32
    %c0_i32_0 = arith.constant 0 : i32
    return %c0_i32, %arg1 : i32, i32
  }
  func.func @transform_3(%arg0: i32, %arg1: i32) -> (i32, i32) {
    %c0_i32 = arith.constant 0 : i32
    %c0_i32_0 = arith.constant 0 : i32
    return %arg1, %c0_i32 : i32, i32
  }
  func.func @transform_4(%arg0: i32, %arg1: i32) -> (i32, i32) {
    %c0_i32 = arith.constant 0 : i32
    %c0_i32_0 = arith.constant 0 : i32
    %c0_i32_1 = arith.constant 0 : i32
    return %c0_i32, %c0_i32_0 : i32, i32
  }
  func.func @transform_5(%arg0: i32, %arg1: i32) -> (i32, i32) {
    %c0_i32 = arith.constant 0 : i32
    %c0_i32_0 = arith.constant 0 : i32
    return %arg0, %c0_i32 : i32, i32
  }
}

</mosaic_0001>

<llo_original>
// kernel: tpu_custom_call.1
$region0: #{tpu_custom_call.1}
  #allocation0 [shape = 'u32[]', space=smem, size = 0x4, offset = 0x4, fixed_abs, tag = 'smem constant byte address 0x4 - core index']
  #allocation1 [shape = 'u32[144,128]{1,0:T(1,128)}', space=vmem, size = 0x12000, scoped, tag = 'internal scratch']
  #allocation2 [shape = 'f32[16,128]{1,0:T(8,128)}', space=vmem, size = 0x2000, scoped, tag = 'scratch operand']
  %s0 = inlined_call_operand.hbm [shape: f32[16,32], index: 0, kind: input, shape index: {}]
  %s1 = inlined_call_operand.hbm [shape: f32[32,128], index: 1, kind: input, shape index: {}]
  %s2 = inlined_call_operand.vmem [shape: f32[1,128], index: 2, kind: input, shape index: {}]
  %s3 = inlined_call_operand.hbm [shape: f32[128,128], index: 3, kind: input, shape index: {}]
  %s4 = inlined_call_operand.vmem [shape: f32[1,128], index: 4, kind: input, shape index: {}]
  %s5 = inlined_call_operand.hbm [shape: f32[16,128], index: 5, kind: output, shape index: {}]
  %s6 = sld [smem:[#allocation0]]
  $region50: #{tpu_custom_call.1} parent=0
    _
  %s8 = ssub.s32 1, %s6
  %s9 = scalar_select 0, %s8, %s6
  $region1: #{tpu_custom_call.1} parent=0
    #allocation3 [shape = 'u8[8192]{0}', space=vmem, size = 0x2000, scoped, tag = 'input window, operand 0, single buffered']
    #allocation4 [shape = 's32[1]{0}', space=sflag, size = 0x4, scoped, tag = 'scoped memory for tpu_custom_call.1']
    #allocation5 [shape = 's32[1]{0}', space=sflag, size = 0x4, scoped, tag = 'scoped memory for tpu_custom_call.1']
    #allocation6 [shape = 'u8[16384]{0}', space=vmem, size = 0x4000, scoped, tag = 'input window, operand 1, single buffered']
    #allocation7 [shape = 's32[1]{0}', space=sflag, size = 0x4, scoped, tag = 'scoped memory for tpu_custom_call.1']
    #allocation8 [shape = 'u8[65536]{0}', space=vmem, size = 0x10000, scoped, tag = 'input window, operand 3, single buffered']
    #allocation9 [shape = 'u8[8192]{0}', space=vmem, size = 0x2000, scoped, tag = 'output window, operand 0, single buffered']
    %10 = vsyncpa [#allocation4], 0
    %11 = vsyncpa [#allocation7], 0
    %12 = vsyncpa [#allocation5], 0
    // Predicated region
    $region2: #{tpu_custom_call.1} parent=1 // pred_check
      _
    $region3: #{tpu_custom_call.1} parent=1 // pred_check_branch
      %14 = sbr.rel (0) target = $region5
    $region4: #{tpu_custom_call.1} parent=1 // pred_region
      %s16 = ssub.s32 256, 256
      %17 = vsyncadd [#allocation4], %s16
      %s18 = sshll.u32 [#allocation3], 4
      %s19 = int_to_ptr.vmem [resolvable:$true] %s18
      %24 = dma.hbm_to_vmem [thread:$0]  %s0, 256, %s19, [#allocation4], 128, 128, 8
    $region5: #{tpu_custom_call.1} parent=1 // pred_fallthru
      _
    // Predicated region
    $region6: #{tpu_custom_call.1} parent=1 // pred_check
      _
    $region7: #{tpu_custom_call.1} parent=1 // pred_check_branch
      %26 = sbr.rel (0) target = $region9
    $region8: #{tpu_custom_call.1} parent=1 // pred_region
      %s28 = ssub.s32 512, 512
      %29 = vsyncadd [#allocation7], %s28
      %s30 = sshll.u32 [#allocation6], 4
      %s31 = int_to_ptr.vmem [resolvable:$true] %s30
      %36 = dma.hbm_to_vmem [thread:$0]  %s1, 512, %s31, [#allocation7], 128, 128, 8
    $region9: #{tpu_custom_call.1} parent=1 // pred_fallthru
      _
    // Predicated region
    $region10: #{tpu_custom_call.1} parent=1 // pred_check
      _
    $region11: #{tpu_custom_call.1} parent=1 // pred_check_branch
      %38 = sbr.rel (0) target = $region13
    $region12: #{tpu_custom_call.1} parent=1 // pred_region
      _
    $region13: #{tpu_custom_call.1} parent=1 // pred_fallthru
      _
    // Predicated region
    $region14: #{tpu_custom_call.1} parent=1 // pred_check
      _
    $region15: #{tpu_custom_call.1} parent=1 // pred_check_branch
      %40 = sbr.rel (0) target = $region17
    $region16: #{tpu_custom_call.1} parent=1 // pred_region
      %s42 = ssub.s32 2048, 2048
      %43 = vsyncadd [#allocation7], %s42
      %s44 = sshll.u32 [#allocation8], 4
      %s45 = int_to_ptr.vmem [resolvable:$true] %s44
      %50 = dma.hbm_to_vmem [thread:$0]  %s3, 2048, %s45, [#allocation7], 128, 128, 8
    $region17: #{tpu_custom_call.1} parent=1 // pred_fallthru
      _
    // Predicated region
    $region18: #{tpu_custom_call.1} parent=1 // pred_check
      _
    $region19: #{tpu_custom_call.1} parent=1 // pred_check_branch
      %52 = sbr.rel (0) target = $region21
    $region20: #{tpu_custom_call.1} parent=1 // pred_region
      _
    $region21: #{tpu_custom_call.1} parent=1 // pred_fallthru
      _
    // Predicated region
    $region22: #{tpu_custom_call.1} parent=1 // pred_check
      _
    $region23: #{tpu_custom_call.1} parent=1 // pred_check_branch
      %54 = sbr.rel (0) target = $region25
    $region24: #{tpu_custom_call.1} parent=1 // pred_region
      %55 = dma.done [#allocation4], 256
    $region25: #{tpu_custom_call.1} parent=1 // pred_fallthru
      _
    // Predicated region
    $region26: #{tpu_custom_call.1} parent=1 // pred_check
      _
    $region27: #{tpu_custom_call.1} parent=1 // pred_check_branch
      %57 = sbr.rel (0) target = $region29
    $region28: #{tpu_custom_call.1} parent=1 // pred_region
      %58 = dma.done [#allocation7], 512
    $region29: #{tpu_custom_call.1} parent=1 // pred_fallthru
      _
    // Predicated region
    $region30: #{tpu_custom_call.1} parent=1 // pred_check
      _
    $region31: #{tpu_custom_call.1} parent=1 // pred_check_branch
      %60 = sbr.rel (0) target = $region33
    $region32: #{tpu_custom_call.1} parent=1 // pred_region
      %61 = dma.done [#allocation7], 2048
    $region33: #{tpu_custom_call.1} parent=1 // pred_fallthru
      _
    %p62 = scmp.eq.s32.totalorder 0, 0
    // Predicated region
    $region34: #{tpu_custom_call.1} parent=1 // pred_check
      %p63 = pneg %p62
    $region35: #{tpu_custom_call.1} parent=1 // pred_check_branch
      %65 = sbr.rel (%p63) target = $region37
    $region36: #{tpu_custom_call.1} parent=1 // pred_region
      %66 = vst [vmem:[#allocation2] sm:$0xff] 0.0
      %67 = vst [vmem:[#allocation2 + $0x8] sm:$0xff] 0.0
    $region37: #{tpu_custom_call.1} parent=1 // pred_fallthru
      _
    %v68 = vld [vmem:[#allocation3] sm:$0xff]
    %v69 = vld [vmem:[#allocation3 + $0x8] sm:$0xff]
    %v70 = vld [vmem:[#allocation6] sm:$0xff]
    %v71 = vld [vmem:[#allocation6 + $0x8] sm:$0xff]
    %v72 = vld [vmem:[#allocation6 + $0x10] sm:$0xff]
    %v73 = vld [vmem:[#allocation6 + $0x18] sm:$0xff]
    %v74 = vld [vmem:[%s2] sm:$0x1]
    %v76 = vlaneseq
    %v77 = vshrl.u32 %v76, 7
    %v78 = vsub.s32 0, %v77
    %v79 = vrot.slane %v74, %v78
    %vm81 = vcmask 261120
    %v83 = vsel %vm81, %v68, 0
    %v86 = vsel %vm81, %v69, 0
    %88 = vmatprep.subr.mxu0 0.0
    %89 = vmatpush1.msra.mxu0 %v70
    %90 = vmatprep.subr.mxu0 0.0
    %91 = vmatpush1.msra.mxu0 %v71
    %92 = vmatprep.subr.mxu0 0.0
    %93 = vmatpush1.msra.mxu0 %v72
    %94 = vmatprep.subr.mxu0 0.0
    %95 = vmatpush1.msra.mxu0 %v73
    %96 = vmatprep.subr.mxu0 0.0
    %97 = vmatpush1.msra.mxu0 0.0
    %98 = vmatprep.subr.mxu0 0.0
    %99 = vmatpush1.msra.mxu0 0.0
    %100 = vmatprep.subr.mxu0 0.0
    %101 = vmatpush1.msra.mxu0 0.0
    %102 = vmatprep.subr.mxu0 0.0
    %103 = vmatpush1.msra.mxu0 0.0
    %104 = vmatprep.subr.mxu0 0.0
    %105 = vmatpush1.msra.mxu0 0.0
    %106 = vmatprep.subr.mxu0 0.0
    %107 = vmatpush1.msra.mxu0 0.0
    %108 = vmatprep.subr.mxu0 0.0
    %109 = vmatpush1.msra.mxu0 0.0
    %110 = vmatprep.subr.mxu0 0.0
    %111 = vmatpush1.msra.mxu0 0.0
    %112 = vmatprep.subr.mxu0 0.0
    %113 = vmatpush1.msra.mxu0 0.0
    %114 = vmatprep.subr.mxu0 0.0
    %115 = vmatpush1.msra.mxu0 0.0
    %116 = vmatprep.subr.mxu0 0.0
    %117 = vmatpush1.msra.mxu0 0.0
    %118 = vmatprep.subr.mxu0 0.0
    %119 = vmatpush1.msra.mxu0 0.0
    %120 = vmatprep.subr.mxu0 0.0
    %121 = vmatpush1.msra.mxu0 0.0
    %122 = vmatprep.subr.mxu0 0.0
    %123 = vmatpush1.msra.mxu0 0.0
    %124 = vmatprep.subr.mxu0 0.0
    %125 = vmatpush1.msra.mxu0 0.0
    %126 = vmatprep.subr.mxu0 0.0
    %127 = vmatpush1.msra.mxu0 0.0
    %128 = vmatprep.subr.mxu0 0.0
    %129 = vmatpush1.msra.mxu0 0.0
    %130 = vmatprep.subr.mxu0 0.0
    %131 = vmatpush1.msra.mxu0 0.0
    %132 = vmatprep.subr.mxu0 0.0
    %133 = vmatpush1.msra.mxu0 0.0
    %134 = vmatprep.subr.mxu0 0.0
    %135 = vmatpush1.msra.mxu0 0.0
    %136 = vmatprep.subr.mxu0 0.0
    %137 = vmatpush1.msra.mxu0 0.0
    %138 = vmatprep.subr.mxu0 0.0
    %139 = vmatpush1.msra.mxu0 0.0
    %140 = vmatprep.subr.mxu0 0.0
    %141 = vmatpush1.msra.mxu0 0.0
    %142 = vmatprep.subr.mxu0 0.0
    %143 = vmatpush1.msra.mxu0 0.0
    %144 = vmatprep.subr.mxu0 0.0
    %145 = vmatpush1.msra.mxu0 0.0
    %146 = vmatprep.subr.mxu0 0.0
    %147 = vmatpush1.msra.mxu0 0.0
    %148 = vmatprep.subr.mxu0 0.0
    %149 = vmatpush1.msra.mxu0 0.0
    %150 = vmatprep.subr.mxu0 0.0
    %151 = vmatpush1.msra.mxu0 0.0
    %152 = vmatprep.mubr.f32.mxu0 0.0
    %153 = vmatmul.mubr.f32.gmra.mrb[0].mxu0 %v83
    %v154 = vpop.f32.mrb[0].mxu0
    %v155 = vadd.f32 %v79, %v154
    %v156 = vpop.f32.mrb[0].mxu0
    %157 = vmatprep.mubr.f32.mxu0 0.0
    %158 = vmatmul.mubr.f32.gmra.mrb[0].mxu0 %v86
    %v159 = vpop.f32.mrb[0].mxu0
    %v160 = vadd.f32 %v79, %v159
    %v161 = vpop.f32.mrb[0].mxu0
    %162 = vdwg.mxu0
    %v163 = vmul.f32 %v155, 0.5
    %v164 = vmul.f32 %v160, 0.5
    %v165 = vmul.f32 %v155, 0.70710677
    %v166 = vmul.f32 %v160, 0.70710677
    %v167 = verf.f32.pop %v165
    %v168 = verf.f32.pop %v166
    %v169 = vadd.f32 %v167, 1.0
    %v170 = vadd.f32 %v168, 1.0
    %v171 = vmul.f32 %v163, %v169
    %v172 = vmul.f32 %v164, %v170
    %v173 = vld [vmem:[#allocation2] sm:$0xff]
    %v174 = vld [vmem:[#allocation2 + $0x8] sm:$0xff]
    %v175 = vld [vmem:[#allocation8] sm:$0xff]
    %v176 = vld [vmem:[#allocation8 + $0x8] sm:$0xff]
    %v177 = vld [vmem:[#allocation8 + $0x10] sm:$0xff]
    %v178 = vld [vmem:[#allocation8 + $0x18] sm:$0xff]
    %v179 = vld [vmem:[#allocation8 + $0x20] sm:$0xff]
    %v180 = vld [vmem:[#allocation8 + $0x28] sm:$0xff]
    %v181 = vld [vmem:[#allocation8 + $0x30] sm:$0xff]
    %v182 = vld [vmem:[#allocation8 + $0x38] sm:$0xff]
    %v183 = vld [vmem:[#allocation8 + $0x40] sm:$0xff]
    %v184 = vld [vmem:[#allocation8 + $0x48] sm:$0xff]
    %v185 = vld [vmem:[#allocation8 + $0x50] sm:$0xff]
    %v186 = vld [vmem:[#allocation8 + $0x58] sm:$0xff]
    %v187 = vld [vmem:[#allocation8 + $0x60] sm:$0xff]
    %v188 = vld [vmem:[#allocation8 + $0x68] sm:$0xff]
    %v189 = vld [vmem:[#allocation8 + $0x70] sm:$0xff]
    %v190 = vld [vmem:[#allocation8 + $0x78] sm:$0xff]
    %191 = vmatprep.subr.mxu0 0.0
    %192 = vmatpush1.msra.mxu0 %v175
    %193 = vmatprep.subr.mxu0 0.0
    %194 = vmatpush1.msra.mxu0 %v176
    %195 = vmatprep.subr.mxu0 0.0
    %196 = vmatpush1.msra.mxu0 %v177
    %197 = vmatprep.subr.mxu0 0.0
    %198 = vmatpush1.msra.mxu0 %v178
    %199 = vmatprep.subr.mxu0 0.0
    %200 = vmatpush1.msra.mxu0 %v179
    %201 = vmatprep.subr.mxu0 0.0
    %202 = vmatpush1.msra.mxu0 %v180
    %203 = vmatprep.subr.mxu0 0.0
    %204 = vmatpush1.msra.mxu0 %v181
    %205 = vmatprep.subr.mxu0 0.0
    %206 = vmatpush1.msra.mxu0 %v182
    %207 = vmatprep.subr.mxu0 0.0
    %208 = vmatpush1.msra.mxu0 %v183
    %209 = vmatprep.subr.mxu0 0.0
    %210 = vmatpush1.msra.mxu0 %v184
    %211 = vmatprep.subr.mxu0 0.0
    %212 = vmatpush1.msra.mxu0 %v185
    %213 = vmatprep.subr.mxu0 0.0
    %214 = vmatpush1.msra.mxu0 %v186
    %215 = vmatprep.subr.mxu0 0.0
    %216 = vmatpush1.msra.mxu0 %v187
    %217 = vmatprep.subr.mxu0 0.0
    %218 = vmatpush1.msra.mxu0 %v188
    %219 = vmatprep.subr.mxu0 0.0
    %220 = vmatpush1.msra.mxu0 %v189
    %221 = vmatprep.subr.mxu0 0.0
    %222 = vmatpush1.msra.mxu0 %v190
    %223 = vmatprep.subr.mxu0 0.0
    %224 = vmatpush1.msra.mxu0 0.0
    %225 = vmatprep.subr.mxu0 0.0
    %226 = vmatpush1.msra.mxu0 0.0
    %227 = vmatprep.subr.mxu0 0.0
    %228 = vmatpush1.msra.mxu0 0.0
    %229 = vmatprep.subr.mxu0 0.0
    %230 = vmatpush1.msra.mxu0 0.0
    %231 = vmatprep.subr.mxu0 0.0
    %232 = vmatpush1.msra.mxu0 0.0
    %233 = vmatprep.subr.mxu0 0.0
    %234 = vmatpush1.msra.mxu0 0.0
    %235 = vmatprep.subr.mxu0 0.0
    %236 = vmatpush1.msra.mxu0 0.0
    %237 = vmatprep.subr.mxu0 0.0
    %238 = vmatpush1.msra.mxu0 0.0
    %239 = vmatprep.subr.mxu0 0.0
    %240 = vmatpush1.msra.mxu0 0.0
    %241 = vmatprep.subr.mxu0 0.0
    %242 = vmatpush1.msra.mxu0 0.0
    %243 = vmatprep.subr.mxu0 0.0
    %244 = vmatpush1.msra.mxu0 0.0
    %245 = vmatprep.subr.mxu0 0.0
    %246 = vmatpush1.msra.mxu0 0.0
    %247 = vmatprep.subr.mxu0 0.0
    %248 = vmatpush1.msra.mxu0 0.0
    %249 = vmatprep.subr.mxu0 0.0
    %250 = vmatpush1.msra.mxu0 0.0
    %251 = vmatprep.subr.mxu0 0.0
    %252 = vmatpush1.msra.mxu0 0.0
    %253 = vmatprep.subr.mxu0 0.0
    %254 = vmatpush1.msra.mxu0 0.0
    %255 = vmatprep.mubr.f32.mxu0 0.0
    %256 = vmatmul.mubr.f32.gmra.mrb[0].mxu0 %v171
    %v257 = vpop.f32.mrb[0].mxu0
    %v258 = vadd.f32 0.0, %v257
    %v259 = vpop.f32.mrb[0].mxu0
    %260 = vmatprep.mubr.f32.mxu0 0.0
    %261 = vmatmul.mubr.f32.gmra.mrb[0].mxu0 %v172
    %v262 = vpop.f32.mrb[0].mxu0
    %v263 = vadd.f32 0.0, %v262
    %v264 = vpop.f32.mrb[0].mxu0
    %265 = vdwg.mxu0
    %v266 = vadd.f32 %v173, %v258
    %v267 = vadd.f32 %v174, %v263
    %268 = vst [vmem:[#allocation2] sm:$0xff] %v266
    %269 = vst [vmem:[#allocation2 + $0x8] sm:$0xff] %v267
    // Predicated region
    $region38: #{tpu_custom_call.1} parent=1 // pred_check
      %p270 = pneg %p62
    $region39: #{tpu_custom_call.1} parent=1 // pred_check_branch
      %272 = sbr.rel (%p270) target = $region41
    $region40: #{tpu_custom_call.1} parent=1 // pred_region
      %v273 = vld [vmem:[#allocation2] sm:$0xff]
      %v274 = vld [vmem:[#allocation2 + $0x8] sm:$0xff]
      %v275 = vld [vmem:[%s4] sm:$0x1]
      %v277 = vlaneseq
      %v278 = vshrl.u32 %v277, 7
      %v279 = vsub.s32 0, %v278
      %v280 = vrot.slane %v275, %v279
      %v282 = vadd.f32 %v273, %v280
      %v283 = vadd.f32 %v274, %v280
      %284 = vst [vmem:[#allocation9] sm:$0xff] %v282
      %285 = vst [vmem:[#allocation9 + $0x8] sm:$0xff] %v283
    $region41: #{tpu_custom_call.1} parent=1 // pred_fallthru
      _
    // Predicated region
    $region42: #{tpu_custom_call.1} parent=1 // pred_check
      _
    $region43: #{tpu_custom_call.1} parent=1 // pred_check_branch
      %287 = sbr.rel (0) target = $region45
    $region44: #{tpu_custom_call.1} parent=1 // pred_region
      %s289 = ssub.s32 256, 256
      %290 = vsyncadd [#allocation5], %s289
      %s291 = sshll.u32 [#allocation9], 4
      %s292 = int_to_ptr.vmem [resolvable:$true] %s291
      %297 = dma.vmem_to_hbm [thread:$0]  %s292, 256, %s5, [#allocation5], 128, 128, 8
    $region45: #{tpu_custom_call.1} parent=1 // pred_fallthru
      _
    // Predicated region
    $region46: #{tpu_custom_call.1} parent=1 // pred_check
      _
    $region47: #{tpu_custom_call.1} parent=1 // pred_check_branch
      %299 = sbr.rel (0) target = $region49
    $region48: #{tpu_custom_call.1} parent=1 // pred_region
      %300 = dma.done [#allocation5], 256
    $region49: #{tpu_custom_call.1} parent=1 // pred_fallthru
      _
    %301 = vsyncpa [#allocation4], 1
    %302 = vsyncpa [#allocation7], 1
    %303 = vsyncpa [#allocation5], 1

</llo_original>
